<compile_context>
chip_gen: v7x
topology: tpu7x:2x2x1
jax: 0.10.0
libtpu: 0.0.40
codegen_flags: <defaults>
</compile_context>

<pallas_src>
import functools

import numpy as np
import jax
import jax.numpy as jnp
from jax.experimental import pallas as pl
from jax.experimental.pallas import tpu as pltpu

_GELU_K = float(np.sqrt(2.0 / np.pi))


# ----------------------------- Pallas kernel --------------------------------
def _mlp_kernel(x_ref, w_fc_ref, b_fc_ref, w_proj_ref, b_proj_ref,
                out_ref, acc_ref, *, tk, slice_weights):
    k = pl.program_id(1)

    @pl.when(k == 0)
    def _():
        acc_ref[...] = jnp.zeros_like(acc_ref)

    if slice_weights:
        # Weights are resident (grid-invariant full blocks); take the k-th
        # hidden chunk out of the VMEM-resident block.
        off = k * tk
        if tk % 128 == 0:
            off = pl.multiple_of(off, 128)
        w_fc = w_fc_ref[:, pl.ds(off, tk)]       # (C, tk) bf16
        b_fc = b_fc_ref[:, pl.ds(off, tk)]       # (1, tk) f32
        w_proj = w_proj_ref[pl.ds(off, tk), :]   # (tk, C) bf16
    else:
        # Streaming mode: BlockSpecs already deliver the k-th hidden chunk.
        w_fc = w_fc_ref[...]
        b_fc = b_fc_ref[...]
        w_proj = w_proj_ref[...]

    # c_fc chunk: (tm, C) @ (C, tk) -> (tm, tk); bf16 inputs, f32 MXU accumulate
    f = jnp.dot(x_ref[...], w_fc, preferred_element_type=jnp.float32) + b_fc

    # new_gelu (tanh approximation) in f32 (accuracy-safe on all generations)
    g = 0.5 * f * (1.0 + jnp.tanh(_GELU_K * (f + 0.044715 * (f * f * f))))

    # c_proj partial: (tm, tk) @ (tk, C) accumulated over hidden chunks
    acc_ref[...] += jnp.dot(g.astype(jnp.bfloat16), w_proj,
                            preferred_element_type=jnp.float32)

    @pl.when(k == pl.num_programs(1) - 1)
    def _():
        out_ref[...] = (acc_ref[...] + b_proj_ref[...]).astype(out_ref.dtype)
    # TODO(synk): nn.Dropout is an eval-mode no-op here; stochastic dropout
    # (pltpu.prng_random_bits + mask) is not implemented.


# ----------------------------- tiling helpers ---------------------------------
def _round_up(n, m):
    return ((n + m - 1) // m) * m


def _divisor_tile(n, candidates):
    for c in candidates:
        if n % c == 0:
            return c
    return n  # full extent is always a legal block dim


def _vmem_capacity_bytes():
    try:
        return int(pltpu.get_tpu_info().vmem_capacity_bytes)
    except Exception:
        return 64 * 1024 * 1024  # conservative (v7x-sized) fallback


def _working_set_bytes(tm, tk, C, H, resident):
    x_b = 2 * tm * C * 2              # x block, bf16, double-buffered
    out_b = 2 * tm * C * 4            # out block, f32, double-buffered
    acc_b = tm * C * 4                # accumulator scratch
    inter = tm * tk * 6               # f (f32) + g (bf16) intermediates
    if resident:
        w_b = 2 * (C * H * 2 + H * C * 2) + 2 * (H * 4 + C * 4)
    else:
        w_b = 2 * (C * tk * 2 + tk * C * 2) + 2 * (tk * 4 + C * 4)
    return x_b + out_b + acc_b + inter + w_b


# ----------------------------- wrapper ---------------------------------------
def mlp_forward(x, params):
    """x: (B, T, C) float32.  params: dict with w_fc (C,4C), b_fc (1,4C),
    w_proj (4C,C), b_proj (1,C) — y = new_gelu(x@w_fc+b_fc) @ w_proj + b_proj."""
    B, T, C = x.shape
    M = B * T
    H = 4 * C

    vmem_cap = int(0.75 * _vmem_capacity_bytes())

    # ---- tile selection -----------------------------------------------------
    # Hidden-dim chunk (lane dim must be a multiple of 128 or the full extent).
    tk = _divisor_tile(H, (512, 256, 128))

    # Row tile: as large as the roofline wants (>= ~680 rows makes v6e MXU-bound),
    # but keep >= 2 row tiles when M allows so dual-TC chips get parallel work.
    tm_target = 1024
    if M <= tm_target:
        tm = max(8, _round_up(M, 8))
    else:
        tm = tm_target

    # Weights-resident fast path when both bf16 weight matrices (conservatively
    # counted double-buffered) fit in the VMEM budget.
    resident = _working_set_bytes(tm, tk, C, H, True) <= int(0.9 * vmem_cap)
    if not resident:
        # Streaming mode: shrink tk first (it only sets DMA granularity),
        # then tm (the roofline lever) until the working set fits.
        while (_working_set_bytes(tm, tk, C, H, False) > int(0.9 * vmem_cap)
               and tk > 128 and tk % 2 == 0 and H % (tk // 2) == 0):
            tk //= 2
        while (_working_set_bytes(tm, tk, C, H, False) > int(0.9 * vmem_cap)
               and tm > 64):
            tm = max(64, _round_up(tm // 2, 8))

    n_m = -(-M // tm)          # ceil
    n_k = max(1, H // tk)
    M_pad = n_m * tm
    grid = (n_m, n_k)

    # ---- operand preparation --------------------------------------------------
    # Pre-cast x and weights to bf16 (halves HBM traffic & resident VMEM;
    # MXU runs bf16 natively with f32 accumulation). Biases stay f32.
    x2 = x.reshape(M, C).astype(jnp.bfloat16)
    if M_pad != M:
        x2 = jnp.pad(x2, ((0, M_pad - M), (0, 0)))
    w_fc = params["w_fc"].astype(jnp.bfloat16)
    w_proj = params["w_proj"].astype(jnp.bfloat16)
    b_fc = params["b_fc"].astype(jnp.float32)
    b_proj = params["b_proj"].astype(jnp.float32)

    # ---- BlockSpecs -----------------------------------------------------------
    if resident:
        in_specs = [
            pl.BlockSpec((tm, C), lambda i, k: (i, 0)),   # x rows
            pl.BlockSpec((C, H), lambda i, k: (0, 0)),    # w_fc (resident)
            pl.BlockSpec((1, H), lambda i, k: (0, 0)),    # b_fc (resident)
            pl.BlockSpec((H, C), lambda i, k: (0, 0)),    # w_proj (resident)
            pl.BlockSpec((1, C), lambda i, k: (0, 0)),    # b_proj (invariant)
        ]
    else:
        in_specs = [
            pl.BlockSpec((tm, C), lambda i, k: (i, 0)),   # x rows
            pl.BlockSpec((C, tk), lambda i, k: (0, k)),   # w_fc hidden chunk
            pl.BlockSpec((1, tk), lambda i, k: (0, k)),   # b_fc hidden chunk
            pl.BlockSpec((tk, C), lambda i, k: (k, 0)),   # w_proj hidden chunk
            pl.BlockSpec((1, C), lambda i, k: (0, 0)),    # b_proj (invariant)
        ]
    out_spec = pl.BlockSpec((tm, C), lambda i, k: (i, 0))

    # ---- advisory cost estimate ----------------------------------------------
    weight_bytes = (C * H * 2 + H * C * 2) * (1 if resident else n_m)
    cost = pl.CostEstimate(
        flops=4 * M * C * H,
        transcendentals=M * H,
        bytes_accessed=int(M_pad * C * 2       # x (bf16)
                           + M_pad * C * 4     # output (f32)
                           + weight_bytes
                           + H * 4 + C * 4),   # biases
    )

    kernel = functools.partial(_mlp_kernel, tk=tk,
                               slice_weights=resident and n_k > 1)

    out2 = pl.pallas_call(
        kernel,
        out_shape=jax.ShapeDtypeStruct((M_pad, C), x.dtype),
        grid_spec=pltpu.PrefetchScalarGridSpec(
            num_scalar_prefetch=0,
            grid=grid,
            in_specs=in_specs,
            out_specs=out_spec,
            scratch_shapes=[pltpu.VMEM((tm, C), jnp.float32)],
        ),
        compiler_params=pltpu.CompilerParams(
            dimension_semantics=("parallel", "arbitrary"),
            vmem_limit_bytes=vmem_cap),
        cost_estimate=cost,
    )(x2, w_fc, b_fc, w_proj, b_proj)

    return out2[:M].reshape(B, T, C)


# --------------------------- reference (pure JAX) -----------------------------
def mlp_reference(x, params):
    f = x @ params["w_fc"] + params["b_fc"][0]
    g = 0.5 * f * (1.0 + jnp.tanh(_GELU_K * (f + 0.044715 * f ** 3)))
    return g @ params["w_proj"] + params["b_proj"][0]


# ------------------------------- param init -----------------------------------
def init_params(key, ndim):
    ks = jax.random.split(key, 4)
    s = 0.02
    return {
        "w_fc": s * jax.random.normal(ks[0], (ndim, 4 * ndim), jnp.float32),
        "b_fc": s * jax.random.normal(ks[1], (1, 4 * ndim), jnp.float32),
        "w_proj": s * jax.random.normal(ks[2], (4 * ndim, ndim), jnp.float32),
        "b_proj": s * jax.random.normal(ks[3], (1, ndim), jnp.float32),
    }


if __name__ == "__main__":
    B, T, C = 2, 8, 32
    key = jax.random.PRNGKey(0)
    k_x, k_p = jax.random.split(key)
    x = jax.random.normal(k_x, (B, T, C), jnp.float32)
    params = init_params(k_p, C)

    out = mlp_forward(x, params)
    out = jax.block_until_ready(out)

    ref = jax.block_until_ready(mlp_reference(x, params))
    # bf16 matmul inputs (activations + weights) with f32 accumulation
    # -> relaxed tolerance vs the f32 reference.
    np.testing.assert_allclose(np.asarray(out), np.asarray(ref),
                               rtol=2e-2, atol=2e-2)

    print("KERNEL_OK")
</pallas_src>

<mosaic_0001>
module attributes {stable_mosaic.version = 11 : i64} {
  func.func @_mlp_kernel(%arg0: i32, %arg1: i32, %arg2: memref<16x32xbf16, #tpu.memory_space<vmem>>, %arg3: memref<32x128xbf16, #tpu.memory_space<vmem>>, %arg4: memref<1x128xf32, #tpu.memory_space<vmem>>, %arg5: memref<128x32xbf16, #tpu.memory_space<vmem>>, %arg6: memref<1x32xf32, #tpu.memory_space<vmem>>, %arg7: memref<16x32xf32, #tpu.memory_space<vmem>>, %arg8: memref<16x32xf32, #tpu.memory_space<vmem>>) attributes {dimension_semantics = [#tpu.dimension_semantics<parallel>, #tpu.dimension_semantics<arbitrary>], iteration_bounds = array<i64: 1, 1>, scalar_prefetch = 0 : i64, scratch_operands = 1 : i64, tpu.core_type = #tpu.core_type<tc>, window_params = [{transform_indices = @transform_0, window_bounds = array<i64: 16, 32>}, {pipeline_mode = #tpu.pipeline_mode<synchronous>, transform_indices = @transform_1, window_bounds = array<i64: 32, 128>}, {pipeline_mode = #tpu.pipeline_mode<synchronous>, transform_indices = @transform_2, window_bounds = array<i64: 1, 128>}, {pipeline_mode = #tpu.pipeline_mode<synchronous>, transform_indices = @transform_3, window_bounds = array<i64: 128, 32>}, {pipeline_mode = #tpu.pipeline_mode<synchronous>, transform_indices = @transform_4, window_bounds = array<i64: 1, 32>}, {transform_indices = @transform_5, window_bounds = array<i64: 16, 32>}]} {
    %c0_i32 = arith.constant 0 : i32
    %0 = arith.cmpi eq, %arg1, %c0_i32 : i32
    %1 = arith.extui %0 : i1 to i32
    %c0_i32_0 = arith.constant 0 : i32
    %2 = arith.cmpi ne, %1, %c0_i32_0 : i32
    scf.if %2 {
      %cst_19 = arith.constant 0.000000e+00 : f32
      %31 = vector.broadcast %cst_19 : f32 to vector<16x32xf32>
      %c0_20 = arith.constant 0 : index
      %c0_21 = arith.constant 0 : index
      %32 = vector.load %arg8[%c0_20, %c0_21] : memref<16x32xf32, #tpu.memory_space<vmem>>, vector<16x32xf32>
      tpu.vector_store %arg8[%c0_20, %c0_21], %31 {strides = array<i32>} : memref<16x32xf32, #tpu.memory_space<vmem>>, vector<16x32xf32>,
    } else {
    }
    %c0 = arith.constant 0 : index
    %c0_1 = arith.constant 0 : index
    %3 = vector.load %arg3[%c0, %c0_1] : memref<32x128xbf16, #tpu.memory_space<vmem>>, vector<32x128xbf16>
    %c0_2 = arith.constant 0 : index
    %c0_3 = arith.constant 0 : index
    %4 = vector.load %arg4[%c0_2, %c0_3] : memref<1x128xf32, #tpu.memory_space<vmem>>, vector<1x128xf32>
    %c0_4 = arith.constant 0 : index
    %c0_5 = arith.constant 0 : index
    %5 = vector.load %arg5[%c0_4, %c0_5] : memref<128x32xbf16, #tpu.memory_space<vmem>>, vector<128x32xbf16>
    %c0_6 = arith.constant 0 : index
    %c0_7 = arith.constant 0 : index
    %6 = vector.load %arg2[%c0_6, %c0_7] : memref<16x32xbf16, #tpu.memory_space<vmem>>, vector<16x32xbf16>
    %cst = arith.constant dense<0.000000e+00> : vector<16x128xf32>
    %7 = tpu.matmul %6, %3, %cst {dimension_numbers = #tpu.dot_dimension_numbers<[1], [0], [0], [1], [0, 0, 1, 1], [], []>} : vector<16x32xbf16>, vector<32x128xbf16>, vector<16x128xf32> -> vector<16x128xf32>
    %8 = vector.broadcast %4 : vector<1x128xf32> to vector<16x128xf32>
    %9 = arith.addf %7, %8 : vector<16x128xf32>
    %cst_8 = arith.constant 5.000000e-01 : f32
    %10 = vector.broadcast %cst_8 : f32 to vector<16x128xf32>
    %11 = arith.mulf %10, %9 : vector<16x128xf32>
    %12 = arith.mulf %9, %9 : vector<16x128xf32>
    %13 = arith.mulf %12, %9 : vector<16x128xf32>
    %cst_9 = arith.constant 4.471500e-02 : f32
    %14 = vector.broadcast %cst_9 : f32 to vector<16x128xf32>
    %15 = arith.mulf %14, %13 : vector<16x128xf32>
    %16 = arith.addf %9, %15 : vector<16x128xf32>
    %cst_10 = arith.constant 0.797884583 : f32
    %17 = vector.broadcast %cst_10 : f32 to vector<16x128xf32>
    %18 = arith.mulf %17, %16 : vector<16x128xf32>
    %19 = math.tanh %18 : vector<16x128xf32>
    %cst_11 = arith.constant 1.000000e+00 : f32
    %20 = vector.broadcast %cst_11 : f32 to vector<16x128xf32>
    %21 = arith.addf %20, %19 : vector<16x128xf32>
    %22 = arith.mulf %11, %21 : vector<16x128xf32>
    %c0_12 = arith.constant 0 : index
    %c0_13 = arith.constant 0 : index
    %23 = vector.load %arg8[%c0_12, %c0_13] : memref<16x32xf32, #tpu.memory_space<vmem>>, vector<16x32xf32>
    %24 = arith.truncf %22 : vector<16x128xf32> to vector<16x128xbf16>
    %cst_14 = arith.constant dense<0.000000e+00> : vector<16x32xf32>
    %25 = tpu.matmul %24, %5, %cst_14 {dimension_numbers = #tpu.dot_dimension_numbers<[1], [0], [0], [1], [0, 0, 1, 1], [], []>} : vector<16x128xbf16>, vector<128x32xbf16>, vector<16x32xf32> -> vector<16x32xf32>
    %26 = arith.addf %23, %25 : vector<16x32xf32>
    %c0_15 = arith.constant 0 : index
    %c0_16 = arith.constant 0 : index
    %27 = vector.load %arg8[%c0_15, %c0_16] : memref<16x32xf32, #tpu.memory_space<vmem>>, vector<16x32xf32>
    tpu.vector_store %arg8[%c0_15, %c0_16], %26 {strides = array<i32>} : memref<16x32xf32, #tpu.memory_space<vmem>>, vector<16x32xf32>,
    %c0_i32_17 = arith.constant 0 : i32
    %28 = arith.cmpi eq, %arg1, %c0_i32_17 : i32
    %29 = arith.extui %28 : i1 to i32
    %c0_i32_18 = arith.constant 0 : i32
    %30 = arith.cmpi ne, %29, %c0_i32_18 : i32
    scf.if %30 {
      %c0_19 = arith.constant 0 : index
      %c0_20 = arith.constant 0 : index
      %31 = vector.load %arg8[%c0_19, %c0_20] : memref<16x32xf32, #tpu.memory_space<vmem>>, vector<16x32xf32>
      %c0_21 = arith.constant 0 : index
      %c0_22 = arith.constant 0 : index
      %32 = vector.load %arg6[%c0_21, %c0_22] : memref<1x32xf32, #tpu.memory_space<vmem>>, vector<1x32xf32>
      %33 = vector.broadcast %32 : vector<1x32xf32> to vector<16x32xf32>
      %34 = arith.addf %31, %33 : vector<16x32xf32>
      %c0_23 = arith.constant 0 : index
      %c0_24 = arith.constant 0 : index
      %35 = vector.load %arg7[%c0_23, %c0_24] : memref<16x32xf32, #tpu.memory_space<vmem>>, vector<16x32xf32>
      tpu.vector_store %arg7[%c0_23, %c0_24], %34 {strides = array<i32>} : memref<16x32xf32, #tpu.memory_space<vmem>>, vector<16x32xf32>,
    } else {
    }
    return
  }
  func.func @transform_0(%arg0: i32, %arg1: i32) -> (i32, i32) {
    %c0_i32 = arith.constant 0 : i32
    %c0_i32_0 = arith.constant 0 : i32
    return %arg0, %c0_i32 : i32, i32
  }
  func.func @transform_1(%arg0: i32, %arg1: i32) -> (i32, i32) {
    %c0_i32 = arith.constant 0 : i32
    %c0_i32_0 = arith.constant 0 : i32
    %c0_i32_1 = arith.constant 0 : i32
    return %c0_i32, %c0_i32_0 : i32, i32
  }
  func.func @transform_2(%arg0: i32, %arg1: i32) -> (i32, i32) {
    %c0_i32 = arith.constant 0 : i32
    %c0_i32_0 = arith.constant 0 : i32
    %c0_i32_1 = arith.constant 0 : i32
    return %c0_i32, %c0_i32_0 : i32, i32
  }
  func.func @transform_3(%arg0: i32, %arg1: i32) -> (i32, i32) {
    %c0_i32 = arith.constant 0 : i32
    %c0_i32_0 = arith.constant 0 : i32
    %c0_i32_1 = arith.constant 0 : i32
    return %c0_i32, %c0_i32_0 : i32, i32
  }
  func.func @transform_4(%arg0: i32, %arg1: i32) -> (i32, i32) {
    %c0_i32 = arith.constant 0 : i32
    %c0_i32_0 = arith.constant 0 : i32
    %c0_i32_1 = arith.constant 0 : i32
    return %c0_i32, %c0_i32_0 : i32, i32
  }
  func.func @transform_5(%arg0: i32, %arg1: i32) -> (i32, i32) {
    %c0_i32 = arith.constant 0 : i32
    %c0_i32_0 = arith.constant 0 : i32
    return %arg0, %c0_i32 : i32, i32
  }
}

</mosaic_0001>

<llo_original>
// kernel: tpu_custom_call.1
$region0: #{tpu_custom_call.1}
  #allocation0 [shape = 'u32[]', space=smem, size = 0x4, offset = 0x4, fixed_abs, tag = 'smem constant byte address 0x4 - core index']
  #allocation1 [shape = 'u32[144,128]{1,0:T(1,128)}', space=vmem, size = 0x12000, scoped, tag = 'internal scratch']
  #allocation2 [shape = 'f32[16,32]{1,0:T(8,128)}', space=vmem, size = 0x2000, scoped, tag = 'scratch operand']
  %s0 = inlined_call_operand.vmem [shape: bf16[16,32], index: 0, kind: input, shape index: {}]
  %s1 = inlined_call_operand.vmem [shape: bf16[32,128], index: 1, kind: input, shape index: {}]
  %s2 = inlined_call_operand.vmem [shape: f32[1,128], index: 2, kind: input, shape index: {}]
  %s3 = inlined_call_operand.vmem [shape: bf16[128,32], index: 3, kind: input, shape index: {}]
  %s4 = inlined_call_operand.vmem [shape: f32[1,32], index: 4, kind: input, shape index: {}]
  %s5 = inlined_call_operand.hbm [shape: f32[16,32], index: 5, kind: output, shape index: {}]
  %s6 = sld [smem:[#allocation0]]
  $region38: #{tpu_custom_call.1} parent=0
    _
  %s8 = ssub.s32 1, %s6
  %s9 = scalar_select 0, %s8, %s6
  $region1: #{tpu_custom_call.1} parent=0
    #allocation3 [shape = 'u8[8192]{0}', space=vmem, size = 0x2000, scoped, tag = 'output window, operand 0, single buffered']
    #allocation4 [shape = 's32[1]{0}', space=sflag, size = 0x4, scoped, tag = 'scoped memory for tpu_custom_call.1']
    %10 = vsyncpa [#allocation4], 0
    // Predicated region
    $region2: #{tpu_custom_call.1} parent=1 // pred_check
      _
    $region3: #{tpu_custom_call.1} parent=1 // pred_check_branch
      %12 = sbr.rel (0) target = $region5
    $region4: #{tpu_custom_call.1} parent=1 // pred_region
      _
    $region5: #{tpu_custom_call.1} parent=1 // pred_fallthru
      _
    // Predicated region
    $region6: #{tpu_custom_call.1} parent=1 // pred_check
      _
    $region7: #{tpu_custom_call.1} parent=1 // pred_check_branch
      %14 = sbr.rel (0) target = $region9
    $region8: #{tpu_custom_call.1} parent=1 // pred_region
      _
    $region9: #{tpu_custom_call.1} parent=1 // pred_fallthru
      _
    // Predicated region
    $region10: #{tpu_custom_call.1} parent=1 // pred_check
      _
    $region11: #{tpu_custom_call.1} parent=1 // pred_check_branch
      %16 = sbr.rel (0) target = $region13
    $region12: #{tpu_custom_call.1} parent=1 // pred_region
      _
    $region13: #{tpu_custom_call.1} parent=1 // pred_fallthru
      _
    // Predicated region
    $region14: #{tpu_custom_call.1} parent=1 // pred_check
      _
    $region15: #{tpu_custom_call.1} parent=1 // pred_check_branch
      %18 = sbr.rel (0) target = $region17
    $region16: #{tpu_custom_call.1} parent=1 // pred_region
      _
    $region17: #{tpu_custom_call.1} parent=1 // pred_fallthru
      _
    // Predicated region
    $region18: #{tpu_custom_call.1} parent=1 // pred_check
      _
    $region19: #{tpu_custom_call.1} parent=1 // pred_check_branch
      %20 = sbr.rel (0) target = $region21
    $region20: #{tpu_custom_call.1} parent=1 // pred_region
      _
    $region21: #{tpu_custom_call.1} parent=1 // pred_fallthru
      _
    %p22 = scmp.eq.s32.totalorder 0, 0
    // Predicated region
    $region22: #{tpu_custom_call.1} parent=1 // pred_check
      %p23 = pneg %p22
    $region23: #{tpu_custom_call.1} parent=1 // pred_check_branch
      %25 = sbr.rel (%p23) target = $region25
    $region24: #{tpu_custom_call.1} parent=1 // pred_region
      %vm26 = vcmask 261120
      %27 = vst.msk [vmem:[#allocation2] sm:$0xff] %vm26, 0.0
      %28 = vst.msk [vmem:[#allocation2 + $0x8] sm:$0xff] %vm26, 0.0
    $region25: #{tpu_custom_call.1} parent=1 // pred_fallthru
      _
    %v29 = vld [vmem:[%s1] sm:$0xf]
    %v30 = vld [vmem:[%s1 + $0x4] sm:$0xf]
    %v31 = vld [vmem:[%s1 + $0x8] sm:$0xf]
    %v32 = vld [vmem:[%s1 + $0xc] sm:$0xf]
    %v33 = vld [vmem:[%s2] sm:$0x1]
    %v34 = vld [vmem:[%s3] sm:$0xf]
    %v35 = vld [vmem:[%s3 + $0x4] sm:$0xf]
    %v36 = vld [vmem:[%s3 + $0x8] sm:$0xf]
    %v37 = vld [vmem:[%s3 + $0xc] sm:$0xf]
    %v38 = vld [vmem:[%s3 + $0x10] sm:$0xf]
    %v39 = vld [vmem:[%s3 + $0x14] sm:$0xf]
    %v40 = vld [vmem:[%s3 + $0x18] sm:$0xf]
    %v41 = vld [vmem:[%s3 + $0x1c] sm:$0xf]
    %v42 = vld [vmem:[%s3 + $0x20] sm:$0xf]
    %v43 = vld [vmem:[%s3 + $0x24] sm:$0xf]
    %v44 = vld [vmem:[%s3 + $0x28] sm:$0xf]
    %v45 = vld [vmem:[%s3 + $0x2c] sm:$0xf]
    %v46 = vld [vmem:[%s3 + $0x30] sm:$0xf]
    %v47 = vld [vmem:[%s3 + $0x34] sm:$0xf]
    %v48 = vld [vmem:[%s3 + $0x38] sm:$0xf]
    %v49 = vld [vmem:[%s3 + $0x3c] sm:$0xf]
    %v50 = vld [vmem:[%s0] sm:$0xf]
    %v51 = vld [vmem:[%s0 + $0x4] sm:$0xf]
    %v53 = vlaneseq
    %v54 = vshrl.u32 %v53, 7
    %v55 = vsub.s32 0, %v54
    %v56 = vrot.slane %v33, %v55
    %v60 = vunpack.c.l.b16 %v50
    %v61 = vunpack.c.l.b16 %v51
    %v62 = vpack.c.b16 %v61, %v60
    %v67 = vunpack.c.l.b16 %v29
    %v68 = vunpack.c.l.b16 %v30
    %v69 = vunpack.c.l.b16 %v31
    %v70 = vunpack.c.l.b16 %v32
    %v71 = vpack.c.b16 %v68, %v67
    %v72 = vpack.c.b16 %v70, %v69
    %vm75 = vcmask 261120
    %v77 = vsel %vm75, %v62, 0
    %79 = vmatprep.subr.bf16.mxu0 0
    %80 = vmatpush1.bf16.msra.mxu0 %v71
    %81 = vmatprep.subr.bf16.mxu0 0
    %82 = vmatpush1.bf16.msra.mxu0 %v72
    %83 = vmatprep.subr.bf16.mxu0 0
    %84 = vmatpush1.bf16.msra.mxu0 0
    %85 = vmatprep.subr.bf16.mxu0 0
    %86 = vmatpush1.bf16.msra.mxu0 0
    %87 = vmatprep.subr.bf16.mxu0 0
    %88 = vmatpush1.bf16.msra.mxu0 0
    %89 = vmatprep.subr.bf16.mxu0 0
    %90 = vmatpush1.bf16.msra.mxu0 0
    %91 = vmatprep.subr.bf16.mxu0 0
    %92 = vmatpush1.bf16.msra.mxu0 0
    %93 = vmatprep.subr.bf16.mxu0 0
    %94 = vmatpush1.bf16.msra.mxu0 0
    %95 = vmatprep.subr.bf16.mxu0 0
    %96 = vmatpush1.bf16.msra.mxu0 0
    %97 = vmatprep.subr.bf16.mxu0 0
    %98 = vmatpush1.bf16.msra.mxu0 0
    %99 = vmatprep.subr.bf16.mxu0 0
    %100 = vmatpush1.bf16.msra.mxu0 0
    %101 = vmatprep.subr.bf16.mxu0 0
    %102 = vmatpush1.bf16.msra.mxu0 0
    %103 = vmatprep.subr.bf16.mxu0 0
    %104 = vmatpush1.bf16.msra.mxu0 0
    %105 = vmatprep.subr.bf16.mxu0 0
    %106 = vmatpush1.bf16.msra.mxu0 0
    %107 = vmatprep.subr.bf16.mxu0 0
    %108 = vmatpush1.bf16.msra.mxu0 0
    %109 = vmatprep.subr.bf16.mxu0 0
    %110 = vmatpush1.bf16.msra.mxu0 0
    %111 = vmatprep.mubr.bf16.mxu0 0
    %112 = vmatmul.mubr.bf16.gmra.mrb[0].mxu0 %v77
    %v113 = vpop.f32.mrb[0].mxu0
    %v114 = vadd.f32 %v56, %v113
    %v115 = vpop.f32.mrb[0].mxu0
    %v116 = vpop.f32.mrb[0].mxu0
    %v117 = vadd.f32 %v56, %v116
    %v118 = vpop.f32.mrb[0].mxu0
    %119 = vdwg.mxu0
    %v120 = vmul.f32 %v114, 0.5
    %v121 = vmul.f32 %v117, 0.5
    %v122 = vmul.f32 %v114, %v114
    %v123 = vmul.f32 %v117, %v117
    %v124 = vmul.f32 %v122, %v114
    %v125 = vmul.f32 %v123, %v117
    %v126 = vmul.f32 %v124, 0.044715
    %v127 = vmul.f32 %v125, 0.044715
    %v128 = vadd.f32 %v114, %v126
    %v129 = vadd.f32 %v117, %v127
    %v130 = vmul.f32 %v128, 0.7978846
    %v131 = vmul.f32 %v129, 0.7978846
    %v132 = vtanh.pop %v130
    %v133 = vtanh.pop %v131
    %v134 = vadd.f32 %v132, 1.0
    %v135 = vadd.f32 %v133, 1.0
    %v136 = vmul.f32 %v120, %v134
    %v137 = vmul.f32 %v121, %v135
    %v138 = vld [vmem:[#allocation2] sm:$0xff]
    %v139 = vld [vmem:[#allocation2 + $0x8] sm:$0xff]
    %v140 = vpack.c.bf16 %v137, %v136
    %v157 = vunpack.c.l.b16 %v34
    %v158 = vunpack.c.l.b16 %v35
    %v159 = vunpack.c.l.b16 %v36
    %v160 = vunpack.c.l.b16 %v37
    %v161 = vunpack.c.l.b16 %v38
    %v162 = vunpack.c.l.b16 %v39
    %v163 = vunpack.c.l.b16 %v40
    %v164 = vunpack.c.l.b16 %v41
    %v165 = vunpack.c.l.b16 %v42
    %v166 = vunpack.c.l.b16 %v43
    %v167 = vunpack.c.l.b16 %v44
    %v168 = vunpack.c.l.b16 %v45
    %v169 = vunpack.c.l.b16 %v46
    %v170 = vunpack.c.l.b16 %v47
    %v171 = vunpack.c.l.b16 %v48
    %v172 = vunpack.c.l.b16 %v49
    %v173 = vpack.c.b16 %v158, %v157
    %v174 = vpack.c.b16 %v160, %v159
    %v175 = vpack.c.b16 %v162, %v161
    %v176 = vpack.c.b16 %v164, %v163
    %v177 = vpack.c.b16 %v166, %v165
    %v178 = vpack.c.b16 %v168, %v167
    %v179 = vpack.c.b16 %v170, %v169
    %v180 = vpack.c.b16 %v172, %v171
    %189 = vmatprep.subr.bf16.mxu0 0
    %190 = vmatpush1.bf16.msra.mxu0 %v173
    %191 = vmatprep.subr.bf16.mxu0 0
    %192 = vmatpush1.bf16.msra.mxu0 %v174
    %193 = vmatprep.subr.bf16.mxu0 0
    %194 = vmatpush1.bf16.msra.mxu0 %v175
    %195 = vmatprep.subr.bf16.mxu0 0
    %196 = vmatpush1.bf16.msra.mxu0 %v176
    %197 = vmatprep.subr.bf16.mxu0 0
    %198 = vmatpush1.bf16.msra.mxu0 %v177
    %199 = vmatprep.subr.bf16.mxu0 0
    %200 = vmatpush1.bf16.msra.mxu0 %v178
    %201 = vmatprep.subr.bf16.mxu0 0
    %202 = vmatpush1.bf16.msra.mxu0 %v179
    %203 = vmatprep.subr.bf16.mxu0 0
    %204 = vmatpush1.bf16.msra.mxu0 %v180
    %205 = vmatprep.subr.bf16.mxu0 0
    %206 = vmatpush1.bf16.msra.mxu0 0
    %207 = vmatprep.subr.bf16.mxu0 0
    %208 = vmatpush1.bf16.msra.mxu0 0
    %209 = vmatprep.subr.bf16.mxu0 0
    %210 = vmatpush1.bf16.msra.mxu0 0
    %211 = vmatprep.subr.bf16.mxu0 0
    %212 = vmatpush1.bf16.msra.mxu0 0
    %213 = vmatprep.subr.bf16.mxu0 0
    %214 = vmatpush1.bf16.msra.mxu0 0
    %215 = vmatprep.subr.bf16.mxu0 0
    %216 = vmatpush1.bf16.msra.mxu0 0
    %217 = vmatprep.subr.bf16.mxu0 0
    %218 = vmatpush1.bf16.msra.mxu0 0
    %219 = vmatprep.subr.bf16.mxu0 0
    %220 = vmatpush1.bf16.msra.mxu0 0
    %221 = vmatprep.mubr.bf16.mxu0 0
    %222 = vmatmul.mubr.bf16.gmra.mrb[0].mxu0 %v140
    %v223 = vpop.f32.mrb[0].mxu0
    %v224 = vadd.f32 0.0, %v223
    %v225 = vpop.f32.mrb[0].mxu0
    %v226 = vpop.f32.mrb[0].mxu0
    %v227 = vadd.f32 0.0, %v226
    %v228 = vpop.f32.mrb[0].mxu0
    %229 = vdwg.mxu0
    %v230 = vadd.f32 %v138, %v224
    %v231 = vadd.f32 %v139, %v227
    %232 = vst.msk [vmem:[#allocation2] sm:$0xff] %vm75, %v230
    %233 = vst.msk [vmem:[#allocation2 + $0x8] sm:$0xff] %vm75, %v231
    // Predicated region
    $region26: #{tpu_custom_call.1} parent=1 // pred_check
      %p234 = pneg %p22
    $region27: #{tpu_custom_call.1} parent=1 // pred_check_branch
      %236 = sbr.rel (%p234) target = $region29
    $region28: #{tpu_custom_call.1} parent=1 // pred_region
      %v237 = vld [vmem:[#allocation2] sm:$0xff]
      %v238 = vld [vmem:[#allocation2 + $0x8] sm:$0xff]
      %v239 = vld [vmem:[%s4] sm:$0x1]
      %v241 = vlaneseq
      %v242 = vshrl.u32 %v241, 7
      %v243 = vsub.s32 0, %v242
      %v244 = vrot.slane %v239, %v243
      %v246 = vadd.f32 %v237, %v244
      %v247 = vadd.f32 %v238, %v244
      %248 = vst.msk [vmem:[#allocation3] sm:$0xff] %vm75, %v246
      %249 = vst.msk [vmem:[#allocation3 + $0x8] sm:$0xff] %vm75, %v247
    $region29: #{tpu_custom_call.1} parent=1 // pred_fallthru
      _
    // Predicated region
    $region30: #{tpu_custom_call.1} parent=1 // pred_check
      _
    $region31: #{tpu_custom_call.1} parent=1 // pred_check_branch
      %251 = sbr.rel (0) target = $region33
    $region32: #{tpu_custom_call.1} parent=1 // pred_region
      %s253 = ssub.s32 256, 256
      %254 = vsyncadd [#allocation4], %s253
      %s255 = sshll.u32 [#allocation3], 4
      %s256 = int_to_ptr.vmem [resolvable:$true] %s255
      %261 = dma.vmem_to_hbm [thread:$0]  %s256, 256, %s5, [#allocation4], 128, 128, 8
    $region33: #{tpu_custom_call.1} parent=1 // pred_fallthru
      _
    // Predicated region
    $region34: #{tpu_custom_call.1} parent=1 // pred_check
      _
    $region35: #{tpu_custom_call.1} parent=1 // pred_check_branch
      %263 = sbr.rel (0) target = $region37
    $region36: #{tpu_custom_call.1} parent=1 // pred_region
      %264 = dma.done [#allocation4], 256
    $region37: #{tpu_custom_call.1} parent=1 // pred_fallthru
      _
    %265 = vsyncpa [#allocation4], 1

</llo_original>
